<compile_context>
chip_gen: v7x
topology: tpu7x:2x2x1
jax: 0.10.0
libtpu: 0.0.40
codegen_flags: <defaults>
</compile_context>

<pallas_src>
import functools

import jax
import jax.numpy as jnp
from jax.experimental import pallas as pl
from jax.experimental.pallas import tpu as pltpu


def _round_up(x, m):
    return (x + m - 1) // m * m


# ---------------------------------------------------------------------------
# Kernel: per-node linear apply against all L layer-type weight matrices,
# then per-node selection by layer_idx.  One N-tile per grid step.
# ---------------------------------------------------------------------------
def _symlinear_apply_kernel(num_types, out_pad, use_bias,
                            x_ref, lidx_ref, w_ref, *rest):
    if use_bias:
        bias_ref, o_ref = rest
    else:
        (o_ref,) = rest

    # bf16 MXU operands, f32 accumulation; cast x in-kernel (free VPU slot).
    x = x_ref[...].astype(jnp.bfloat16)                        # (tn, in)

    # One lane-dense matmul against ALL layer-type weights at once:
    # columns are [type0 | type1 | ...], each zero-padded to out_pad lanes.
    out_all = jnp.dot(x, w_ref[...],
                      preferred_element_type=jnp.float32)      # (tn, L*out_pad)

    lidx = lidx_ref[...]                                       # (tn, 1) int32
    if use_bias:
        bias = bias_ref[...]                                   # (L, out_pad) f32

    # Per-node selection of its layer type's columns.  Static unroll over the
    # (small) number of layer types; masks are mutually exclusive so plain
    # select-overwrite is enough.  Slices are 128-lane aligned (whole vregs).
    # TODO(synk): if num_layer_types is ever comparable to N, switch to a
    # grouped (sorted) matmul with scalar-prefetch group offsets instead.
    acc = jnp.zeros((x.shape[0], out_pad), jnp.float32)
    for l in range(num_types):
        piece = out_all[:, l * out_pad:(l + 1) * out_pad]
        if use_bias:
            piece = piece + bias[l][None, :]
        acc = jnp.where(lidx == l, piece, acc)

    o_ref[...] = acc.astype(o_ref.dtype)


def _vmem_capacity_bytes():
    try:
        info = pltpu.get_tpu_info()
        cap = getattr(info, "vmem_capacity_bytes", None)
        if cap:
            return int(cap)
    except Exception:
        pass
    return 64 * 1024 * 1024   # assume smallest generation (v7x per-TC) if query fails


def _choose_tile_n(in_f, out_pad, num_types, budget_bytes):
    """Largest N-tile (multiple of 8, <=2048) whose working set fits the budget.

    Counts double-buffering of every in/out spec *including* the
    constant-index_map parameter blocks (Pallas allocates 2 buffers each).
    """
    f32 = 4
    bytes_per_row = (
        2 * f32 * (in_f + 1)              # streamed x + layer_idx blocks (x2 buffers)
        + 2 * f32 * out_pad               # output block (x2 buffers)
        + f32 * num_types * out_pad       # out_all temporary (f32)
        + 2 * in_f                        # bf16 copy of x
        + f32 * out_pad                   # selection accumulator
    )
    resident = (
        2 * 2 * in_f * num_types * out_pad    # W_concat (bf16), double-buffered
        + 2 * f32 * num_types * out_pad       # bias table (f32), double-buffered
    )
    avail = max(budget_bytes - resident, 8 * bytes_per_row)
    tile = (avail // bytes_per_row) // 8 * 8
    return int(max(8, min(2048, tile)))


def sym_linear_forward(params, x, layer_idx):
    """Forward of SymLinearNode. x: (N, in_features), layer_idx: (N,) int32."""
    n, in_f = x.shape
    out_f = params["out_features"]
    use_bias = params["use_bias"]
    num_types = params["embedding"].shape[0]
    out_pad = _round_up(out_f, 128)          # lane-dense output columns

    # ---- Hypernet (L-scaled, tiny): generate the L distinct weight matrices
    # once instead of per node.  Plain XLA; never materializes (N, in, out).
    h_types = jnp.maximum(
        params["embedding"].astype(jnp.float32) @ params["W1"] + params["b1"], 0.0)
    w_types = (h_types @ params["Ww"] + params["bw"]).reshape(num_types, in_f, out_f)
    w_pad = jnp.pad(w_types, ((0, 0), (0, 0), (0, out_pad - out_f)))
    # Lane-dense RHS (in, L*out_pad), produced directly in bf16 for the MXU.
    w_concat = jnp.transpose(w_pad, (1, 0, 2)).reshape(
        in_f, num_types * out_pad).astype(jnp.bfloat16)
    if use_bias:
        b_types = h_types @ params["Wb"] + params["bb"]                    # (L, out)
        b_pad = jnp.pad(b_types, ((0, 0), (0, out_pad - out_f))).astype(jnp.float32)

    lidx2d = layer_idx.astype(jnp.int32).reshape(n, 1)
    x = x.astype(jnp.float32)

    # ---- Chip-aware tiling / VMEM limits.
    vmem_cap = _vmem_capacity_bytes()
    budget = vmem_cap // 2
    vmem_limit = min(int(vmem_cap * 0.75), vmem_cap - 8 * 1024 * 1024)

    tile_n = _choose_tile_n(in_f, out_pad, num_types, budget)
    # Guarantee >=2 N-tiles whenever possible so both v7x TensorCores get work.
    tile_n = min(tile_n, max(8, _round_up(-(-n // 2), 8)))
    grid = (pl.cdiv(n, tile_n),)     # ragged last tile: Pallas masks OOB stores

    row = lambda i: (i, 0)           # streamed per-tile blocks
    const = lambda i: (0, 0)         # VMEM-resident parameter blocks

    in_specs = [
        pl.BlockSpec((tile_n, in_f), row),
        pl.BlockSpec((tile_n, 1), row),
        pl.BlockSpec((in_f, num_types * out_pad), const),
    ]
    args = [x, lidx2d, w_concat]
    if use_bias:
        in_specs.append(pl.BlockSpec((num_types, out_pad), const))
        args.append(b_pad)

    flops = 2 * n * in_f * num_types * out_pad + 2 * n * num_types * out_pad
    bytes_accessed = (n * in_f * 4 + n * 4                       # x, layer_idx
                      + in_f * num_types * out_pad * 2           # W_concat (bf16)
                      + (num_types * out_pad * 4 if use_bias else 0)
                      + n * out_pad * 4)                         # output

    out_padded = pl.pallas_call(
        functools.partial(_symlinear_apply_kernel, num_types, out_pad, use_bias),
        out_shape=jax.ShapeDtypeStruct((n, out_pad), jnp.float32),
        grid=grid,
        in_specs=in_specs,
        out_specs=pl.BlockSpec((tile_n, out_pad), row),
        compiler_params=pltpu.CompilerParams(
            dimension_semantics=("parallel",),
            vmem_limit_bytes=int(vmem_limit)),
        cost_estimate=pl.CostEstimate(
            flops=int(flops), transcendentals=0,
            bytes_accessed=int(bytes_accessed)),
    )(*args)
    return out_padded[:, :out_f]


def init_params(key, in_features, out_features, hyper_hidden, num_layer_types,
                use_bias=True):
    k0, k1, k2, k3, k4, k5, k6 = jax.random.split(key, 7)
    scale = 0.1
    return {
        "in_features": in_features,
        "out_features": out_features,
        "use_bias": use_bias,
        "embedding": scale * jax.random.normal(
            k0, (num_layer_types, hyper_hidden), jnp.float32),
        "W1": scale * jax.random.normal(k1, (hyper_hidden, hyper_hidden), jnp.float32),
        "b1": scale * jax.random.normal(k2, (1, hyper_hidden), jnp.float32),
        "Ww": scale * jax.random.normal(
            k3, (hyper_hidden, in_features * out_features), jnp.float32),
        "bw": scale * jax.random.normal(k4, (1, in_features * out_features), jnp.float32),
        "Wb": scale * jax.random.normal(k5, (hyper_hidden, out_features), jnp.float32),
        "bb": scale * jax.random.normal(k6, (1, out_features), jnp.float32),
    }


def reference_forward(params, x, layer_idx):
    """Pure-JAX f32 reference mirroring the PyTorch forward (weights materialized)."""
    emb = params["embedding"][layer_idx]
    h = jnp.maximum(emb @ params["W1"] + params["b1"], 0.0)
    wflat = h @ params["Ww"] + params["bw"]
    bias = h @ params["Wb"] + params["bb"]
    n = x.shape[0]
    weights = wflat.reshape(n, params["in_features"], params["out_features"])
    out = jnp.matmul(x[:, None, :], weights)            # (N, 1, out)
    if params["use_bias"]:
        out = out + bias[:, None, :]
    return out[:, 0, :]


if __name__ == "__main__":
    in_features = 32
    out_features = 32
    hyper_hidden = 64
    num_layer_types = 4
    n_nodes = 37        # non-multiple of 8/tile: exercises the ragged last tile

    key = jax.random.PRNGKey(0)
    kp, kx, ki = jax.random.split(key, 3)

    params = init_params(kp, in_features, out_features, hyper_hidden,
                         num_layer_types, use_bias=True)
    x = jax.random.normal(kx, (n_nodes, in_features), jnp.float32)
    layer_idx = jax.random.randint(ki, (n_nodes,), 0, num_layer_types, jnp.int32)

    out = jax.block_until_ready(sym_linear_forward(params, x, layer_idx))
    ref = reference_forward(params, x, layer_idx)
    assert out.shape == (n_nodes, out_features)
    # bf16 MXU operands with f32 accumulation -> looser tolerance than pure f32.
    assert jnp.allclose(out, ref, atol=3e-2, rtol=3e-2), "mismatch vs reference (bias)"

    # use_bias=False path: bias table is not passed and the add is skipped.
    params_nb = dict(params, use_bias=False)
    out_nb = jax.block_until_ready(sym_linear_forward(params_nb, x, layer_idx))
    ref_nb = reference_forward(params_nb, x, layer_idx)
    assert jnp.allclose(out_nb, ref_nb, atol=3e-2, rtol=3e-2), "mismatch vs reference (no bias)"

    print("KERNEL_OK")
</pallas_src>

<mosaic_0001>
module attributes {stable_mosaic.version = 11 : i64} {
  func.func @_symlinear_apply_kernel(%arg0: i32, %arg1: memref<24x32xf32, #tpu.memory_space<vmem>>, %arg2: memref<24x1xi32, #tpu.memory_space<vmem>>, %arg3: memref<32x512xbf16, #tpu.memory_space<vmem>>, %arg4: memref<4x128xf32, #tpu.memory_space<vmem>>, %arg5: memref<24x128xf32, #tpu.memory_space<vmem>>) attributes {dimension_semantics = [#tpu.dimension_semantics<parallel>], iteration_bounds = array<i64: 2>, scalar_prefetch = 0 : i64, scratch_operands = 0 : i64, tpu.core_type = #tpu.core_type<tc>, window_params = [{transform_indices = @transform_0, window_bounds = array<i64: 24, 32>}, {transform_indices = @transform_1, window_bounds = array<i64: 24, 1>}, {pipeline_mode = #tpu.pipeline_mode<synchronous>, transform_indices = @transform_2, window_bounds = array<i64: 32, 512>}, {pipeline_mode = #tpu.pipeline_mode<synchronous>, transform_indices = @transform_3, window_bounds = array<i64: 4, 128>}, {transform_indices = @transform_4, window_bounds = array<i64: 24, 128>}]} {
    %c0 = arith.constant 0 : index
    %c0_0 = arith.constant 0 : index
    %0 = vector.load %arg1[%c0, %c0_0] : memref<24x32xf32, #tpu.memory_space<vmem>>, vector<24x32xf32>
    %1 = arith.truncf %0 : vector<24x32xf32> to vector<24x32xbf16>
    %c0_1 = arith.constant 0 : index
    %c0_2 = arith.constant 0 : index
    %2 = vector.load %arg3[%c0_1, %c0_2] : memref<32x512xbf16, #tpu.memory_space<vmem>>, vector<32x512xbf16>
    %cst = arith.constant dense<0.000000e+00> : vector<24x512xf32>
    %3 = tpu.matmul %1, %2, %cst {dimension_numbers = #tpu.dot_dimension_numbers<[1], [0], [0], [1], [0, 0, 1, 1], [], []>} : vector<24x32xbf16>, vector<32x512xbf16>, vector<24x512xf32> -> vector<24x512xf32>
    %c0_3 = arith.constant 0 : index
    %c0_4 = arith.constant 0 : index
    %4 = vector.load %arg2[%c0_3, %c0_4] : memref<24x1xi32, #tpu.memory_space<vmem>>, vector<24x1xi32>
    %c0_5 = arith.constant 0 : index
    %c0_6 = arith.constant 0 : index
    %5 = vector.load %arg4[%c0_5, %c0_6] : memref<4x128xf32, #tpu.memory_space<vmem>>, vector<4x128xf32>
    %cst_7 = arith.constant 0.000000e+00 : f32
    %6 = vector.broadcast %cst_7 : f32 to vector<24x128xf32>
    %7 = vector.extract_strided_slice %3 {offsets = [0, 0], sizes = [24, 128], strides = [1, 1]} : vector<24x512xf32> to vector<24x128xf32>
    %8 = vector.extract_strided_slice %5 {offsets = [0, 0], sizes = [1, 128], strides = [1, 1]} : vector<4x128xf32> to vector<1x128xf32>
    %9 = vector.shape_cast %8 : vector<1x128xf32> to vector<128xf32>
    %10 = vector.shape_cast %9 : vector<128xf32> to vector<1x128xf32>
    %11 = vector.broadcast %10 : vector<1x128xf32> to vector<24x128xf32>
    %12 = arith.addf %7, %11 : vector<24x128xf32>
    %c0_i32 = arith.constant 0 : i32
    %13 = vector.broadcast %c0_i32 : i32 to vector<24x1xi32>
    %14 = arith.cmpi eq, %4, %13 : vector<24x1xi32>
    %15 = vector.shape_cast %14 : vector<24x1xi1> to vector<24x1xi1>
    %16 = vector.broadcast %15 : vector<24x1xi1> to vector<24x128xi1>
    %17 = arith.select %16, %12, %6 : vector<24x128xi1>, vector<24x128xf32>
    %18 = vector.extract_strided_slice %3 {offsets = [0, 128], sizes = [24, 128], strides = [1, 1]} : vector<24x512xf32> to vector<24x128xf32>
    %19 = vector.extract_strided_slice %5 {offsets = [1, 0], sizes = [1, 128], strides = [1, 1]} : vector<4x128xf32> to vector<1x128xf32>
    %20 = vector.shape_cast %19 : vector<1x128xf32> to vector<128xf32>
    %21 = vector.shape_cast %20 : vector<128xf32> to vector<1x128xf32>
    %22 = vector.broadcast %21 : vector<1x128xf32> to vector<24x128xf32>
    %23 = arith.addf %18, %22 : vector<24x128xf32>
    %c1_i32 = arith.constant 1 : i32
    %24 = vector.broadcast %c1_i32 : i32 to vector<24x1xi32>
    %25 = arith.cmpi eq, %4, %24 : vector<24x1xi32>
    %26 = vector.shape_cast %25 : vector<24x1xi1> to vector<24x1xi1>
    %27 = vector.broadcast %26 : vector<24x1xi1> to vector<24x128xi1>
    %28 = arith.select %27, %23, %17 : vector<24x128xi1>, vector<24x128xf32>
    %29 = vector.extract_strided_slice %3 {offsets = [0, 256], sizes = [24, 128], strides = [1, 1]} : vector<24x512xf32> to vector<24x128xf32>
    %30 = vector.extract_strided_slice %5 {offsets = [2, 0], sizes = [1, 128], strides = [1, 1]} : vector<4x128xf32> to vector<1x128xf32>
    %31 = vector.shape_cast %30 : vector<1x128xf32> to vector<128xf32>
    %32 = vector.shape_cast %31 : vector<128xf32> to vector<1x128xf32>
    %33 = vector.broadcast %32 : vector<1x128xf32> to vector<24x128xf32>
    %34 = arith.addf %29, %33 : vector<24x128xf32>
    %c2_i32 = arith.constant 2 : i32
    %35 = vector.broadcast %c2_i32 : i32 to vector<24x1xi32>
    %36 = arith.cmpi eq, %4, %35 : vector<24x1xi32>
    %37 = vector.shape_cast %36 : vector<24x1xi1> to vector<24x1xi1>
    %38 = vector.broadcast %37 : vector<24x1xi1> to vector<24x128xi1>
    %39 = arith.select %38, %34, %28 : vector<24x128xi1>, vector<24x128xf32>
    %40 = vector.extract_strided_slice %3 {offsets = [0, 384], sizes = [24, 128], strides = [1, 1]} : vector<24x512xf32> to vector<24x128xf32>
    %41 = vector.extract_strided_slice %5 {offsets = [3, 0], sizes = [1, 128], strides = [1, 1]} : vector<4x128xf32> to vector<1x128xf32>
    %42 = vector.shape_cast %41 : vector<1x128xf32> to vector<128xf32>
    %43 = vector.shape_cast %42 : vector<128xf32> to vector<1x128xf32>
    %44 = vector.broadcast %43 : vector<1x128xf32> to vector<24x128xf32>
    %45 = arith.addf %40, %44 : vector<24x128xf32>
    %c3_i32 = arith.constant 3 : i32
    %46 = vector.broadcast %c3_i32 : i32 to vector<24x1xi32>
    %47 = arith.cmpi eq, %4, %46 : vector<24x1xi32>
    %48 = vector.shape_cast %47 : vector<24x1xi1> to vector<24x1xi1>
    %49 = vector.broadcast %48 : vector<24x1xi1> to vector<24x128xi1>
    %50 = arith.select %49, %45, %39 : vector<24x128xi1>, vector<24x128xf32>
    %c0_8 = arith.constant 0 : index
    %c0_9 = arith.constant 0 : index
    %51 = vector.load %arg5[%c0_8, %c0_9] : memref<24x128xf32, #tpu.memory_space<vmem>>, vector<24x128xf32>
    tpu.vector_store %arg5[%c0_8, %c0_9], %50 {strides = array<i32>} : memref<24x128xf32, #tpu.memory_space<vmem>>, vector<24x128xf32>,
    return
  }
  func.func @transform_0(%arg0: i32) -> (i32, i32) {
    %c0_i32 = arith.constant 0 : i32
    %c0_i32_0 = arith.constant 0 : i32
    return %arg0, %c0_i32 : i32, i32
  }
  func.func @transform_1(%arg0: i32) -> (i32, i32) {
    %c0_i32 = arith.constant 0 : i32
    %c0_i32_0 = arith.constant 0 : i32
    return %arg0, %c0_i32 : i32, i32
  }
  func.func @transform_2(%arg0: i32) -> (i32, i32) {
    %c0_i32 = arith.constant 0 : i32
    %c0_i32_0 = arith.constant 0 : i32
    %c0_i32_1 = arith.constant 0 : i32
    return %c0_i32, %c0_i32_0 : i32, i32
  }
  func.func @transform_3(%arg0: i32) -> (i32, i32) {
    %c0_i32 = arith.constant 0 : i32
    %c0_i32_0 = arith.constant 0 : i32
    %c0_i32_1 = arith.constant 0 : i32
    return %c0_i32, %c0_i32_0 : i32, i32
  }
  func.func @transform_4(%arg0: i32) -> (i32, i32) {
    %c0_i32 = arith.constant 0 : i32
    %c0_i32_0 = arith.constant 0 : i32
    return %arg0, %c0_i32 : i32, i32
  }
}

</mosaic_0001>

<llo_original>
// kernel: tpu_custom_call.1
$region0: #{tpu_custom_call.1}
  #allocation0 [shape = 'u32[]', space=smem, size = 0x4, offset = 0x4, fixed_abs, tag = 'smem constant byte address 0x4 - core index']
  #allocation1 [shape = 'u32[144,128]{1,0:T(1,128)}', space=vmem, size = 0x12000, scoped, tag = 'internal scratch']
  %s0 = inlined_call_operand.vmem [shape: f32[37,32], index: 0, kind: input, shape index: {}]
  %s1 = inlined_call_operand.vmem [shape: s32[37,1], index: 1, kind: input, shape index: {}]
  %s2 = inlined_call_operand.vmem [shape: bf16[32,512], index: 2, kind: input, shape index: {}]
  %s3 = inlined_call_operand.vmem [shape: f32[4,128], index: 3, kind: input, shape index: {}]
  %s4 = inlined_call_operand.hbm [shape: f32[37,128], index: 4, kind: output, shape index: {}]
  %s5 = sld [smem:[#allocation0]]
  $region49: #{tpu_custom_call.1} parent=0
    _
  %s7 = ssub.s32 1, %s5
  %s8 = scalar_select 0, %s7, %s5
  $region1: #{tpu_custom_call.1} parent=0
    #allocation2 [shape = 'u8[24576]{0}', space=vmem, size = 0x6000, scoped, tag = 'output window, operand 0']
    #allocation3 [shape = 's32[2]{0}', space=sflag, size = 0x8, scoped, tag = 'scoped memory for tpu_custom_call.1']
    %9 = vsyncpa [#allocation3], 0
    %s10 = scalar_lea.sflag [#allocation3], 1
    %11 = vsyncpa %s10, 0
    loop: start=0, step=1, limit=4
    $region2: #{tpu_custom_call.1} parent=1 // loop_pre_header
      _
    $region3: #{tpu_custom_call.1} parent=1 // loop_header
      %s13 = sphi 0, %s17
      %p14 = scmp.ge.s32.totalorder %s13, 4
      %s23 = sphi 0, %s25
      %s26 = sphi 0, %s23
      %s27 = sphi 0, %s26
      %s43 = sphi 0, %s27
      %s49 = sphi 0, %s51
      %s52 = sphi 0, %s49
      %s53 = sphi 0, %s52
      %s69 = sphi 0, %s53
      %s73 = sphi 0, %s73
      %s75 = sphi 0, %s73
      %s76 = sphi 0, %s75
      %s90 = sphi 0, %s76
      %s94 = sphi 0, %s94
      %s96 = sphi 0, %s94
      %s97 = sphi 0, %s96
      %s111 = sphi 0, %s97
      %s117 = sphi 0, %s119
      %s120 = sphi 0, %s117
      %s121 = sphi 0, %s120
      %s137 = sphi 0, %s121
    $region4: #{tpu_custom_call.1} parent=1 // loop_header_branch
      %16 = sbr.rel (%p14) target = $region8
    $region5: #{tpu_custom_call.1} parent=1 // loop_body
      %s18 = ssub.s32 %s13, 1
      %s19 = ssub.s32 %s13, 2
      %s20 = sadd.s32 %s13, 1
      %s21 = ssub.s32 %s13, %s20
      %p22 = scmp.eq.s32.totalorder %s21, 0
      %s24 = sadd.s32 %s23, 1
      %s25 = scalar_select %p22, %s23, %s24
      %p28 = pneg %p22
      %p29 = scmp.eq.s32.totalorder %s13, 1
      %p30 = por %p28, %p29
      %p31 = scmp.ne.s32.totalorder %s23, %s26
      %p32 = scmp.eq.s32.totalorder %s13, 0
      %p33 = por %p31, %p32
      %p34 = scmp.ne.s32.totalorder %s23, %s26
      %p35 = scmp.eq.s32.totalorder %s18, 1
      %p36 = por %p34, %p35
      %p37 = scmp.ne.s32.totalorder %s26, %s27
      %p38 = scmp.eq.s32.totalorder %s18, 0
      %p39 = por %p37, %p38
      %p40 = scmp.ne.s32.totalorder %s26, %s27
      %p41 = scmp.eq.s32.totalorder %s19, 1
      %p42 = por %p40, %p41
      %p44 = scmp.ne.s32.totalorder %s27, %s43
      %p45 = scmp.eq.s32.totalorder %s19, 0
      %p46 = por %p44, %p45
      %s47 = ssub.s32 %s13, %s20
      %p48 = scmp.eq.s32.totalorder %s47, 0
      %s50 = sadd.s32 %s49, 1
      %s51 = scalar_select %p48, %s49, %s50
      %p54 = pneg %p48
      %p55 = scmp.eq.s32.totalorder %s13, 1
      %p56 = por %p54, %p55
      %p57 = scmp.ne.s32.totalorder %s49, %s52
      %p58 = scmp.eq.s32.totalorder %s13, 0
      %p59 = por %p57, %p58
      %p60 = scmp.ne.s32.totalorder %s49, %s52
      %p61 = scmp.eq.s32.totalorder %s18, 1
      %p62 = por %p60, %p61
      %p63 = scmp.ne.s32.totalorder %s52, %s53
      %p64 = scmp.eq.s32.totalorder %s18, 0
      %p65 = por %p63, %p64
      %p66 = scmp.ne.s32.totalorder %s52, %s53
      %p67 = scmp.eq.s32.totalorder %s19, 1
      %p68 = por %p66, %p67
      %p70 = scmp.ne.s32.totalorder %s53, %s69
      %p71 = scmp.eq.s32.totalorder %s19, 0
      %p72 = por %p70, %p71
      %s74 = sadd.s32 %s73, 1
      %p77 = scmp.eq.s32.totalorder %s13, 1
      %p78 = scmp.ne.s32.totalorder %s73, %s75
      %p79 = scmp.eq.s32.totalorder %s13, 0
      %p80 = por %p78, %p79
      %p81 = scmp.ne.s32.totalorder %s73, %s75
      %p82 = scmp.eq.s32.totalorder %s18, 1
      %p83 = por %p81, %p82
      %p84 = scmp.ne.s32.totalorder %s75, %s76
      %p85 = scmp.eq.s32.totalorder %s18, 0
      %p86 = por %p84, %p85
      %p87 = scmp.ne.s32.totalorder %s75, %s76
      %p88 = scmp.eq.s32.totalorder %s19, 1
      %p89 = por %p87, %p88
      %p91 = scmp.ne.s32.totalorder %s76, %s90
      %p92 = scmp.eq.s32.totalorder %s19, 0
      %p93 = por %p91, %p92
      %s95 = sadd.s32 %s94, 1
      %p98 = scmp.eq.s32.totalorder %s13, 1
      %p99 = scmp.ne.s32.totalorder %s94, %s96
      %p100 = scmp.eq.s32.totalorder %s13, 0
      %p101 = por %p99, %p100
      %p102 = scmp.ne.s32.totalorder %s94, %s96
      %p103 = scmp.eq.s32.totalorder %s18, 1
      %p104 = por %p102, %p103
      %p105 = scmp.ne.s32.totalorder %s96, %s97
      %p106 = scmp.eq.s32.totalorder %s18, 0
      %p107 = por %p105, %p106
      %p108 = scmp.ne.s32.totalorder %s96, %s97
      %p109 = scmp.eq.s32.totalorder %s19, 1
      %p110 = por %p108, %p109
      %p112 = scmp.ne.s32.totalorder %s97, %s111
      %p113 = scmp.eq.s32.totalorder %s19, 0
      %p114 = por %p112, %p113
      %s115 = ssub.s32 %s13, %s20
      %p116 = scmp.eq.s32.totalorder %s115, 0
      %s118 = sadd.s32 %s117, 1
      %s119 = scalar_select %p116, %s117, %s118
      %p122 = pneg %p116
      %p123 = scmp.eq.s32.totalorder %s13, 1
      %p124 = por %p122, %p123
      %p125 = scmp.ne.s32.totalorder %s117, %s120
      %p126 = scmp.eq.s32.totalorder %s13, 0
      %p127 = por %p125, %p126
      %p128 = scmp.ne.s32.totalorder %s117, %s120
      %p129 = scmp.eq.s32.totalorder %s18, 1
      %p130 = por %p128, %p129
      %p131 = scmp.ne.s32.totalorder %s120, %s121
      %p132 = scmp.eq.s32.totalorder %s18, 0
      %p133 = por %p131, %p132
      %p134 = scmp.ne.s32.totalorder %s120, %s121
      %p135 = scmp.eq.s32.totalorder %s19, 1
      %p136 = por %p134, %p135
      %p138 = scmp.ne.s32.totalorder %s121, %s137
      %p139 = scmp.eq.s32.totalorder %s19, 0
      %p140 = por %p138, %p139
      %p141 = scmp.le.s32.totalorder 1, %s13
      %p142 = scmp.lt.s32.totalorder %s13, 3
      %p143 = pnand %p141, %p142
      %p144 = pneg %p143
      // Predicated region
      $region9: #{tpu_custom_call.1} parent=5 // pred_check
        _
      $region10: #{tpu_custom_call.1} parent=5 // pred_check_branch
        %146 = sbr.rel (%p143) target = $region12
      $region11: #{tpu_custom_call.1} parent=5 // pred_region
        %s147 = ssub.s32 %s13, 1
        // Predicated region
        $region13: #{tpu_custom_call.1} parent=11 // pred_check
          %p148 = pneg %p86
        $region14: #{tpu_custom_call.1} parent=11 // pred_check_branch
          %150 = sbr.rel (%p148) target = $region16
        $region15: #{tpu_custom_call.1} parent=11 // pred_region
          _
        $region16: #{tpu_custom_call.1} parent=11 // pred_fallthru
          _
        // Predicated region
        $region17: #{tpu_custom_call.1} parent=11 // pred_check
          %p151 = pneg %p107
        $region18: #{tpu_custom_call.1} parent=11 // pred_check_branch
          %153 = sbr.rel (%p151) target = $region20
        $region19: #{tpu_custom_call.1} parent=11 // pred_region
          _
        $region20: #{tpu_custom_call.1} parent=11 // pred_fallthru
          _
      $region12: #{tpu_custom_call.1} parent=5 // pred_fallthru
        _
      %p154 = scmp.lt.s32.totalorder %s13, 2
      // Predicated region
      $region21: #{tpu_custom_call.1} parent=5 // pred_check
        %p155 = pneg %p154
      $region22: #{tpu_custom_call.1} parent=5 // pred_check_branch
        %157 = sbr.rel (%p155) target = $region24
      $region23: #{tpu_custom_call.1} parent=5 // pred_region
        // Predicated region
        $region25: #{tpu_custom_call.1} parent=23 // pred_check
          %p158 = pneg %p33
        $region26: #{tpu_custom_call.1} parent=23 // pred_check_branch
          %160 = sbr.rel (%p158) target = $region28
        $region27: #{tpu_custom_call.1} parent=23 // pred_region
          %s161 = smul.u32 3, %s13
          %s162 = ssub.s32 5, %s161
          %p163 = scmp.lt.s32.totalorder %s162, 3
          %s164 = scalar_select %p163, %s162, 3
          %s165 = smul.u32 128, %s164
          %p166 = scmp.lt.s32.totalorder %s161, 4
          %s167 = scalar_select %p166, %s161, 4
          %s168 = smul.addr %s167, 8
          %s169 = scalar_lea.vmem %s0, %s168
          %s170 = smul.u32 3, %s13
          %s171 = ssub.s32 5, %s170
          %p172 = scmp.lt.s32.totalorder %s171, 3
          %s173 = scalar_select %p172, %s171, 3
          %s174 = smul.u32 128, %s173
        $region28: #{tpu_custom_call.1} parent=23 // pred_fallthru
          _
        // Predicated region
        $region29: #{tpu_custom_call.1} parent=23 // pred_check
          %p175 = pneg %p59
        $region30: #{tpu_custom_call.1} parent=23 // pred_check_branch
          %177 = sbr.rel (%p175) target = $region32
        $region31: #{tpu_custom_call.1} parent=23 // pred_region
          %s178 = smul.u32 3, %s13
          %s179 = ssub.s32 5, %s178
          %p180 = scmp.lt.s32.totalorder %s179, 3
          %s181 = scalar_select %p180, %s179, 3
          %s182 = smul.u32 128, %s181
          %p183 = scmp.lt.s32.totalorder %s178, 4
          %s184 = scalar_select %p183, %s178, 4
          %s185 = smul.addr %s184, 8
          %s186 = scalar_lea.vmem %s1, %s185
          %s187 = smul.u32 3, %s13
          %s188 = ssub.s32 5, %s187
          %p189 = scmp.lt.s32.totalorder %s188, 3
          %s190 = scalar_select %p189, %s188, 3
          %s191 = smul.u32 128, %s190
        $region32: #{tpu_custom_call.1} parent=23 // pred_fallthru
          _
      $region24: #{tpu_custom_call.1} parent=5 // pred_fallthru
        _
      %p192 = scmp.le.s32.totalorder 1, %s13
      %p193 = scmp.lt.s32.totalorder %s13, 3
      %p194 = pnand %p192, %p193
      %p195 = pneg %p194
      // Predicated region
      $region33: #{tpu_custom_call.1} parent=5 // pred_check
        _
      $region34: #{tpu_custom_call.1} parent=5 // pred_check_branch
        %197 = sbr.rel (%p194) target = $region36
      $region35: #{tpu_custom_call.1} parent=5 // pred_region
        %s198 = ssub.s32 %s13, 1
        %s199 = smul.u32 3, %s18
        %s200 = ssub.s32 5, %s199
        %p201 = scmp.lt.s32.totalorder %s200, 3
        %s202 = scalar_select %p201, %s200, 3
        %s203 = smul.u32 128, %s202
        %p204 = scmp.lt.s32.totalorder %s199, 4
        %s205 = scalar_select %p204, %s199, 4
        %s206 = smul.addr %s205, 8
        %s207 = scalar_lea.vmem %s0, %s206
        %p208 = pneg %p39
        %p209 = pneg %p36
        %s210 = smul.u32 3, %s18
        %s211 = ssub.s32 5, %s210
        %p212 = scmp.lt.s32.totalorder %s211, 3
        %s213 = scalar_select %p212, %s211, 3
        %s214 = smul.u32 128, %s213
        %p215 = scmp.lt.s32.totalorder %s210, 4
        %s216 = scalar_select %p215, %s210, 4
        %s217 = smul.addr %s216, 8
        %s218 = scalar_lea.vmem %s1, %s217
        %p219 = pneg %p65
        %p220 = pneg %p62
        %p221 = pneg %p86
        %p222 = pneg %p83
        %p223 = pneg %p107
        %p224 = pneg %p104
        %p225 = pneg %p133
        %p226 = pneg %p130
        %s227 = sand.u32 %s120, 1
        %s228 = scalar_lea.sflag [#allocation3], %s227
        %s229 = sand.u32 %s120, 1
        %s230 = smul.addr %s229, 24
        %s231 = scalar_lea.vmem [#allocation2], %s230
        %s232 = smul.u32 3, %s18
        %s233 = ssub.s32 5, %s232
        %p234 = scmp.lt.s32.totalorder %s233, 3
        %s235 = scalar_select %p234, %s233, 3
        %s236 = smul.u32 128, %s235
        %p237 = scmp.lt.s32.totalorder %s232, 4
        %s238 = scalar_select %p237, %s232, 4
        %s239 = smul.addr %s238, 8
        %s240 = scalar_lea.vmem %s0, %s239
        %s241 = smul.u32 3, %s18
        %s242 = ssub.s32 5, %s241
        %p243 = scmp.lt.s32.totalorder %s242, 3
        %s244 = scalar_select %p243, %s242, 3
        %s245 = smul.u32 128, %s244
        %s246 = smul.u32 3, %s18
        %s247 = ssub.s32 5, %s246
        %p248 = scmp.lt.s32.totalorder %s247, 3
        %s249 = scalar_select %p248, %s247, 3
        %s250 = smul.u32 128, %s249
        %p251 = scmp.lt.s32.totalorder %s246, 4
        %s252 = scalar_select %p251, %s246, 4
        %s253 = smul.addr %s252, 8
        %s254 = scalar_lea.vmem %s1, %s253
        %s255 = smul.u32 3, %s18
        %s256 = ssub.s32 5, %s255
        %p257 = scmp.lt.s32.totalorder %s256, 3
        %s258 = scalar_select %p257, %s256, 3
        %s259 = smul.u32 128, %s258
        %s260 = smul.u32 3, %s18
        %s261 = ssub.s32 5, %s260
        %p262 = scmp.lt.s32.totalorder %s261, 3
        %s263 = scalar_select %p262, %s261, 3
        %s264 = smul.u32 128, %s263
        %v266 = vld [vmem:[%s240] sm:$0xff]
        %v267 = vld [vmem:[%s240 + $0x8] sm:$0xff]
        %v268 = vld [vmem:[%s240 + $0x10] sm:$0xff]
        %v269 = vpack.c.bf16 %v267, %v266
        %v270 = vpack.c.bf16 %v268, %v268
        %v271 = vld [vmem:[%s2] sm:$0xff]
        %v272 = vld [vmem:[%s2 + $0x8] sm:$0xff]
        %v273 = vld [vmem:[%s2 + $0x10] sm:$0xff]
        %v274 = vld [vmem:[%s2 + $0x18] sm:$0xff]
        %v275 = vld [vmem:[%s2 + $0x20] sm:$0xff]
        %v276 = vld [vmem:[%s2 + $0x28] sm:$0xff]
        %v277 = vld [vmem:[%s2 + $0x30] sm:$0xff]
        %v278 = vld [vmem:[%s2 + $0x38] sm:$0xff]
        %v287 = vunpack.c.l.b16 %v271
        %v288 = vunpack.c.h.b16 %v271
        %v289 = vunpack.c.l.b16 %v272
        %v290 = vunpack.c.h.b16 %v272
        %v291 = vunpack.c.l.b16 %v273
        %v292 = vunpack.c.h.b16 %v273
        %v293 = vunpack.c.l.b16 %v274
        %v294 = vunpack.c.h.b16 %v274
        %v295 = vunpack.c.l.b16 %v275
        %v296 = vunpack.c.h.b16 %v275
        %v297 = vunpack.c.l.b16 %v276
        %v298 = vunpack.c.h.b16 %v276
        %v299 = vunpack.c.l.b16 %v277
        %v300 = vunpack.c.h.b16 %v277
        %v301 = vunpack.c.l.b16 %v278
        %v302 = vunpack.c.h.b16 %v278
        %v303 = vpack.c.b16 %v291, %v287
        %v304 = vpack.c.b16 %v292, %v288
        %v305 = vpack.c.b16 %v293, %v289
        %v306 = vpack.c.b16 %v294, %v290
        %v307 = vpack.c.b16 %v299, %v295
        %v308 = vpack.c.b16 %v300, %v296
        %v309 = vpack.c.b16 %v301, %v297
        %v310 = vpack.c.b16 %v302, %v298
        %vm319 = vcmask 261120
        %v321 = vsel %vm319, %v269, 0
        %v324 = vsel %vm319, %v270, 0
        %326 = vmatprep.subr.bf16.mxu0 %v304
        %327 = vmatpush1.bf16.msra.mxu0 %v303
        %328 = vmatprep.subr.bf16.mxu0 %v308
        %329 = vmatpush1.bf16.msra.mxu0 %v307
        %330 = vmatprep.subr.bf16.mxu0 0
        %331 = vmatpush1.bf16.msra.mxu0 0
        %332 = vmatprep.subr.bf16.mxu0 0
        %333 = vmatpush1.bf16.msra.mxu0 0
        %334 = vmatprep.subr.bf16.mxu0 0
        %335 = vmatpush1.bf16.msra.mxu0 0
        %336 = vmatprep.subr.bf16.mxu0 0
        %337 = vmatpush1.bf16.msra.mxu0 0
        %338 = vmatprep.subr.bf16.mxu0 0
        %339 = vmatpush1.bf16.msra.mxu0 0
        %340 = vmatprep.subr.bf16.mxu0 0
        %341 = vmatpush1.bf16.msra.mxu0 0
        %342 = vmatprep.subr.bf16.mxu0 0
        %343 = vmatpush1.bf16.msra.mxu0 0
        %344 = vmatprep.subr.bf16.mxu0 0
        %345 = vmatpush1.bf16.msra.mxu0 0
        %346 = vmatprep.subr.bf16.mxu0 0
        %347 = vmatpush1.bf16.msra.mxu0 0
        %348 = vmatprep.subr.bf16.mxu0 0
        %349 = vmatpush1.bf16.msra.mxu0 0
        %350 = vmatprep.subr.bf16.mxu0 0
        %351 = vmatpush1.bf16.msra.mxu0 0
        %352 = vmatprep.subr.bf16.mxu0 0
        %353 = vmatpush1.bf16.msra.mxu0 0
        %354 = vmatprep.subr.bf16.mxu0 0
        %355 = vmatpush1.bf16.msra.mxu0 0
        %356 = vmatprep.subr.bf16.mxu0 0
        %357 = vmatpush1.bf16.msra.mxu0 0
        %358 = vmatprep.mubr.bf16.mxu0 0
        %359 = vmatmul.mubr.bf16.gmra.mrb[0].mxu0 %v321
        %v360 = vpop.f32.mrb[0].mxu0
        %v361 = vadd.f32 0.0, %v360
        %v362 = vpop.f32.mrb[0].mxu0
        %v363 = vadd.f32 0.0, %v362
        %v364 = vpop.f32.mrb[0].mxu0
        %v365 = vadd.f32 0.0, %v364
        %v366 = vpop.f32.mrb[0].mxu0
        %v367 = vadd.f32 0.0, %v366
        %368 = vmatprep.mubr.bf16.mxu0 0
        %369 = vmatmul.mubr.bf16.gmra.mrb[0].mxu0 %v324
        %v370 = vpop.f32.mrb[0].mxu0
        %v371 = vadd.f32 0.0, %v370
        %v372 = vpop.f32.mrb[0].mxu0
        %v373 = vadd.f32 0.0, %v372
        %v374 = vpop.f32.mrb[0].mxu0
        %v375 = vpop.f32.mrb[0].mxu0
        %376 = vdwg.mxu0
        %377 = vmatprep.subr.bf16.mxu0 %v306
        %378 = vmatpush1.bf16.msra.mxu0 %v305
        %379 = vmatprep.subr.bf16.mxu0 %v310
        %380 = vmatpush1.bf16.msra.mxu0 %v309
        %381 = vmatprep.subr.bf16.mxu0 0
        %382 = vmatpush1.bf16.msra.mxu0 0
        %383 = vmatprep.subr.bf16.mxu0 0
        %384 = vmatpush1.bf16.msra.mxu0 0
        %385 = vmatprep.subr.bf16.mxu0 0
        %386 = vmatpush1.bf16.msra.mxu0 0
        %387 = vmatprep.subr.bf16.mxu0 0
        %388 = vmatpush1.bf16.msra.mxu0 0
        %389 = vmatprep.subr.bf16.mxu0 0
        %390 = vmatpush1.bf16.msra.mxu0 0
        %391 = vmatprep.subr.bf16.mxu0 0
        %392 = vmatpush1.bf16.msra.mxu0 0
        %393 = vmatprep.subr.bf16.mxu0 0
        %394 = vmatpush1.bf16.msra.mxu0 0
        %395 = vmatprep.subr.bf16.mxu0 0
        %396 = vmatpush1.bf16.msra.mxu0 0
        %397 = vmatprep.subr.bf16.mxu0 0
        %398 = vmatpush1.bf16.msra.mxu0 0
        %399 = vmatprep.subr.bf16.mxu0 0
        %400 = vmatpush1.bf16.msra.mxu0 0
        %401 = vmatprep.subr.bf16.mxu0 0
        %402 = vmatpush1.bf16.msra.mxu0 0
        %403 = vmatprep.subr.bf16.mxu0 0
        %404 = vmatpush1.bf16.msra.mxu0 0
        %405 = vmatprep.subr.bf16.mxu0 0
        %406 = vmatpush1.bf16.msra.mxu0 0
        %407 = vmatprep.subr.bf16.mxu0 0
        %408 = vmatpush1.bf16.msra.mxu0 0
        %409 = vmatprep.mubr.bf16.mxu0 0
        %410 = vmatmul.mubr.bf16.gmra.mrb[0].mxu0 %v321
        %v411 = vpop.f32.mrb[0].mxu0
        %v412 = vadd.f32 0.0, %v411
        %v413 = vpop.f32.mrb[0].mxu0
        %v414 = vadd.f32 0.0, %v413
        %v415 = vpop.f32.mrb[0].mxu0
        %v416 = vadd.f32 0.0, %v415
        %v417 = vpop.f32.mrb[0].mxu0
        %v418 = vadd.f32 0.0, %v417
        %419 = vmatprep.mubr.bf16.mxu0 0
        %420 = vmatmul.mubr.bf16.gmra.mrb[0].mxu0 %v324
        %v421 = vpop.f32.mrb[0].mxu0
        %v422 = vadd.f32 0.0, %v421
        %v423 = vpop.f32.mrb[0].mxu0
        %v424 = vadd.f32 0.0, %v423
        %v425 = vpop.f32.mrb[0].mxu0
        %v426 = vpop.f32.mrb[0].mxu0
        %427 = vdwg.mxu0
        %v428 = vld [vmem:[%s254] sm:$0xff]
        %v429 = vld [vmem:[%s254 + $0x8] sm:$0xff]
        %v430 = vld [vmem:[%s254 + $0x10] sm:$0xff]
        %v431 = vld [vmem:[%s3] sm:$0xf]
        %v432 = vlaneseq
        %v433 = vshrl.u32 %v432, 7
        %v434 = vsub.s32 0, %v433
        %v435 = vrot.slane %v431, %v434
        %v436 = vadd.f32 %v361, %v435
        %v437 = vadd.f32 %v365, %v435
        %v438 = vadd.f32 %v371, %v435
        %vm439 = vcmp.eq.s32.totalorder %v428, 0
        %vm440 = vcmp.eq.s32.totalorder %v429, 0
        %vm441 = vcmp.eq.s32.totalorder %v430, 0
        %v442 = vsel %vm439, 1, 0
        %v443 = vsel %vm440, 1, 0
        %v444 = vsel %vm441, 1, 0
        %445 = vset.pattern.permute.xlu0 0
        %446 = vperm.xlu0 %445, %v442
        %v447 = vpop.permute.xlu0 %446
        %448 = vset.pattern.permute.xlu0 0
        %449 = vperm.xlu0 %448, %v443
        %v450 = vpop.permute.xlu0 %449
        %451 = vset.pattern.permute.xlu0 0
        %452 = vperm.xlu0 %451, %v444
        %v453 = vpop.permute.xlu0 %452
        %vm454 = vcmp.eq.s32.totalorder %v447, 1
        %vm455 = vcmp.eq.s32.totalorder %v450, 1
        %vm456 = vcmp.eq.s32.totalorder %v453, 1
        %v457 = vsel %vm454, %v436, 0.0
        %v458 = vsel %vm455, %v437, 0.0
        %v459 = vsel %vm456, %v438, 0.0
        %v460 = vlaneseq
        %v461 = vshrl.u32 %v460, 7
        %v462 = vsub.s32 1, %v461
        %v463 = vrot.slane %v431, %v462
        %v464 = vadd.f32 %v363, %v463
        %v465 = vadd.f32 %v367, %v463
        %v466 = vadd.f32 %v373, %v463
        %vm467 = vcmp.eq.s32.totalorder %v428, 1
        %vm468 = vcmp.eq.s32.totalorder %v429, 1
        %vm469 = vcmp.eq.s32.totalorder %v430, 1
        %v470 = vsel %vm467, 1, 0
        %v471 = vsel %vm468, 1, 0
        %v472 = vsel %vm469, 1, 0
        %473 = vset.pattern.permute.xlu0 0
        %474 = vperm.xlu0 %473, %v470
        %v475 = vpop.permute.xlu0 %474
        %476 = vset.pattern.permute.xlu0 0
        %477 = vperm.xlu0 %476, %v471
        %v478 = vpop.permute.xlu0 %477
        %479 = vset.pattern.permute.xlu0 0
        %480 = vperm.xlu0 %479, %v472
        %v481 = vpop.permute.xlu0 %480
        %vm482 = vcmp.eq.s32.totalorder %v475, 1
        %vm483 = vcmp.eq.s32.totalorder %v478, 1
        %vm484 = vcmp.eq.s32.totalorder %v481, 1
        %v485 = vsel %vm482, %v464, %v457
        %v486 = vsel %vm483, %v465, %v458
        %v487 = vsel %vm484, %v466, %v459
        %v488 = vlaneseq
        %v489 = vshrl.u32 %v488, 7
        %v490 = vsub.s32 2, %v489
        %v491 = vrot.slane %v431, %v490
        %v492 = vadd.f32 %v412, %v491
        %v493 = vadd.f32 %v416, %v491
        %v494 = vadd.f32 %v422, %v491
        %vm495 = vcmp.eq.s32.totalorder %v428, 2
        %vm496 = vcmp.eq.s32.totalorder %v429, 2
        %vm497 = vcmp.eq.s32.totalorder %v430, 2
        %v498 = vsel %vm495, 1, 0
        %v499 = vsel %vm496, 1, 0
        %v500 = vsel %vm497, 1, 0
        %501 = vset.pattern.permute.xlu0 0
        %502 = vperm.xlu0 %501, %v498
        %v503 = vpop.permute.xlu0 %502
        %504 = vset.pattern.permute.xlu0 0
        %505 = vperm.xlu0 %504, %v499
        %v506 = vpop.permute.xlu0 %505
        %507 = vset.pattern.permute.xlu0 0
        %508 = vperm.xlu0 %507, %v500
        %v509 = vpop.permute.xlu0 %508
        %vm510 = vcmp.eq.s32.totalorder %v503, 1
        %vm511 = vcmp.eq.s32.totalorder %v506, 1
        %vm512 = vcmp.eq.s32.totalorder %v509, 1
        %v513 = vsel %vm510, %v492, %v485
        %v514 = vsel %vm511, %v493, %v486
        %v515 = vsel %vm512, %v494, %v487
        %v516 = vlaneseq
        %v517 = vshrl.u32 %v516, 7
        %v518 = vsub.s32 3, %v517
        %v519 = vrot.slane %v431, %v518
        %v520 = vadd.f32 %v414, %v519
        %v521 = vadd.f32 %v418, %v519
        %v522 = vadd.f32 %v424, %v519
        %vm523 = vcmp.eq.s32.totalorder %v428, 3
        %vm524 = vcmp.eq.s32.totalorder %v429, 3
        %vm525 = vcmp.eq.s32.totalorder %v430, 3
        %v526 = vsel %vm523, 1, 0
        %v527 = vsel %vm524, 1, 0
        %v528 = vsel %vm525, 1, 0
        %529 = vset.pattern.permute.xlu0 0
        %530 = vperm.xlu0 %529, %v526
        %v531 = vpop.permute.xlu0 %530
        %532 = vset.pattern.permute.xlu0 0
        %533 = vperm.xlu0 %532, %v527
        %v534 = vpop.permute.xlu0 %533
        %535 = vset.pattern.permute.xlu0 0
        %536 = vperm.xlu0 %535, %v528
        %v537 = vpop.permute.xlu0 %536
        %vm538 = vcmp.eq.s32.totalorder %v531, 1
        %vm539 = vcmp.eq.s32.totalorder %v534, 1
        %vm540 = vcmp.eq.s32.totalorder %v537, 1
        %v541 = vsel %vm538, %v520, %v513
        %v542 = vsel %vm539, %v521, %v514
        %v543 = vsel %vm540, %v522, %v515
        %544 = vst [vmem:[%s231] sm:$0xff] %v541
        %545 = vst [vmem:[%s231 + $0x8] sm:$0xff] %v542
        %546 = vst [vmem:[%s231 + $0x10] sm:$0xff] %v543
        %s547 = sand.u32 %s120, 1
        %s548 = scalar_lea.sflag [#allocation3], %s547
        %s549 = sand.u32 %s120, 1
        %s550 = smul.addr %s549, 24
        %s551 = scalar_lea.vmem [#allocation2], %s550
        // Predicated region
        $region37: #{tpu_custom_call.1} parent=35 // pred_check
          %p552 = pneg %p130
        $region38: #{tpu_custom_call.1} parent=35 // pred_check_branch
          %554 = sbr.rel (%p552) target = $region40
        $region39: #{tpu_custom_call.1} parent=35 // pred_region
          %s555 = smul.u32 3, %s18
          %s556 = ssub.s32 5, %s555
          %p557 = scmp.lt.s32.totalorder %s556, 3
          %s558 = scalar_select %p557, %s556, 3
          %s559 = smul.u32 128, %s558
          %s561 = ssub.s32 384, %s559
          %562 = vsyncadd %s548, %s561
          %p563 = scmp.ne.s32.totalorder 0, %s559
          %s564 = smul.addr %s555, 128
          %s565 = scalar_lea.hbm %s4, %s564
          %s566 = smul.u32 8, %s558
          %s567 = sshll.u32 %s551, 4
          %s568 = int_to_ptr.vmem [resolvable:$true] %s567
          %s569 = sshll.u32 %s566, 4
          %573 = dma.vmem_to_hbm [thread:$0]  (%p563), %s568, %s569, %s565, %s548, 128, 128, 8
        $region40: #{tpu_custom_call.1} parent=35 // pred_fallthru
          _
      $region36: #{tpu_custom_call.1} parent=5 // pred_fallthru
        _
      %p574 = scmp.le.s32.totalorder 2, %s13
      // Predicated region
      $region41: #{tpu_custom_call.1} parent=5 // pred_check
        %p575 = pneg %p574
      $region42: #{tpu_custom_call.1} parent=5 // pred_check_branch
        %577 = sbr.rel (%p575) target = $region44
      $region43: #{tpu_custom_call.1} parent=5 // pred_region
        %s578 = ssub.s32 %s13, 2
        // Predicated region
        $region45: #{tpu_custom_call.1} parent=43 // pred_check
          %p579 = pneg %p136
        $region46: #{tpu_custom_call.1} parent=43 // pred_check_branch
          %581 = sbr.rel (%p579) target = $region48
        $region47: #{tpu_custom_call.1} parent=43 // pred_region
          %s582 = sand.u32 %s121, 1
          %s583 = scalar_lea.sflag [#allocation3], %s582
          %s584 = sand.u32 %s121, 1
          %s585 = smul.addr %s584, 24
          %s586 = scalar_lea.vmem [#allocation2], %s585
          %587 = dma.done %s583, 384
        $region48: #{tpu_custom_call.1} parent=43 // pred_fallthru
          _
      $region44: #{tpu_custom_call.1} parent=5 // pred_fallthru
        _
    $region6: #{tpu_custom_call.1} parent=1 // loop_footer
      %s17 = sadd.s32 1, %s13
    $region7: #{tpu_custom_call.1} parent=1 // loop_footer_branch
      %12 = sbr.rel target = $region3
    $region8: #{tpu_custom_call.1} parent=1 // loop_exit
      _
    %588 = vsyncpa [#allocation3], 1
    %s589 = scalar_lea.sflag [#allocation3], 1
    %590 = vsyncpa %s589, 1

</llo_original>
